<compile_context>
chip_gen: v5e
topology: v5e:2x2
jax: 0.10.0
libtpu: 0.0.40
codegen_flags: <defaults>
</compile_context>

<pallas_src>
import functools

import jax
import jax.numpy as jnp
from jax.experimental import pallas as pl
from jax.experimental.pallas import tpu as pltpu

_LANE = 128
_SUBLANE = 8

_VMEM = pl.BlockSpec(memory_space=pltpu.MemorySpace.VMEM)


# ---------------------------------------------------------------------------
# Fused Pallas kernel: all GIN layers + pooling + classification head
# ---------------------------------------------------------------------------

def _gin_fused_kernel(node_ref, pool_ref, w_ref, f_ref, o_ref,
                      *, h, num_layers, npad):
    """Fused forward:
       for l in layers:  act = ReLU(BN(Lin2(ReLU(BN(Lin1(A_hat @ act))))))
       out = Lin2_head(ReLU(Lin1_head(mean_pool(concat_l(act_l)))))
    BN is pre-folded into the Linear weights; (1+eps)*x is pre-folded into
    A_hat = A + I; concat+lin1_head is computed block-wise per layer; the
    mean pool is sum-pool (bf16 one-hot matmul) * f32 reciprocal counts.
    """
    gp = pool_ref.shape[0]
    n = pool_ref.shape[1]
    cpad = o_ref.shape[1]

    slab = node_ref[...]                          # [N, Npad+H] bf16
    adj = slab[:, :n]                             # [N, N]  bf16  (A + I)
    act = slab[:, npad:npad + h]                  # [N, H]  bf16  (features)
    pool = pool_ref[...]                          # [Gp, N] bf16  0/1 one-hot
    w = w_ref[...]                                # [(L+1)H, W] bf16 weights
    f = f_ref[...]                                # [2L+2+Gp, 128] f32 biases

    inv_cnt = f[2 * num_layers + 2:2 * num_layers + 2 + gp, 0:1]   # [Gp, 1]
    lb1 = f[2 * num_layers:2 * num_layers + 1, :h]                 # [1, H]
    lb2 = f[2 * num_layers + 1:2 * num_layers + 2, :cpad]          # [1, Cpad]
    lw2 = w[num_layers * h:(num_layers + 1) * h, :cpad]            # [H, Cpad]

    head_acc = jnp.zeros((gp, h), jnp.float32)

    for layer in range(num_layers):               # unrolled at trace time
        w1 = w[layer * h:(layer + 1) * h, 0:h]
        w2 = w[layer * h:(layer + 1) * h, h:2 * h]
        lw1 = w[layer * h:(layer + 1) * h, 2 * h:3 * h]
        b1 = f[layer:layer + 1, :h]
        b2 = f[num_layers + layer:num_layers + layer + 1, :h]

        # GIN aggregation: (1+eps)*x_i + sum_{j in N(i)} x_j   (eps = 0)
        agg = jnp.dot(adj, act, preferred_element_type=jnp.float32)
        # Linear1 (+ folded BN1) + ReLU
        z = jnp.dot(agg.astype(jnp.bfloat16), w1,
                    preferred_element_type=jnp.float32) + b1
        z = jnp.maximum(z, 0.0)
        # Linear2 (+ folded BN2) + ReLU
        z = jnp.dot(z.astype(jnp.bfloat16), w2,
                    preferred_element_type=jnp.float32) + b2
        z = jnp.maximum(z, 0.0)
        act = z.astype(jnp.bfloat16)

        # Head contribution of this layer:
        #   mean_pool(z_l) @ W1head_block_l  ==  block of  pool(concat) @ W1head
        # Sum-pool via exact bf16 one-hot matmul, then exact f32 mean scaling.
        pooled = jnp.dot(pool, act, preferred_element_type=jnp.float32) * inv_cnt
        head_acc = head_acc + jnp.dot(pooled.astype(jnp.bfloat16), lw1,
                                      preferred_element_type=jnp.float32)

    t = jnp.maximum(head_acc + lb1, 0.0)
    # TODO(synk): dropout(p=0.5) is identity in eval mode (training=False).
    out = jnp.dot(t.astype(jnp.bfloat16), lw2,
                  preferred_element_type=jnp.float32) + lb2
    o_ref[...] = out.astype(o_ref.dtype)


# ---------------------------------------------------------------------------
# Parameter init (mirrors the PyTorch module; BN in eval mode) and packing
# ---------------------------------------------------------------------------

def init_params(key, num_features, hidden, num_layers, num_classes):
    """Raw parameters with the same shapes as the PyTorch module."""
    def linear(k, fan_in, fan_out):
        kw, kb = jax.random.split(k)
        w = jax.random.normal(kw, (fan_in, fan_out), jnp.float32) * 0.1
        b = jax.random.normal(kb, (fan_out,), jnp.float32) * 0.1
        return w, b

    def bn(k, dim):
        kg, kb, km, kv = jax.random.split(k, 4)
        gamma = 1.0 + 0.1 * jax.random.normal(kg, (dim,), jnp.float32)
        beta = 0.1 * jax.random.normal(kb, (dim,), jnp.float32)
        mean = 0.05 * jax.random.normal(km, (dim,), jnp.float32)
        var = jnp.abs(1.0 + 0.1 * jax.random.normal(kv, (dim,), jnp.float32))
        return gamma, beta, mean, var

    convs = []
    in_dim = num_features
    for _ in range(num_layers):
        key, k1, k2, k3, k4 = jax.random.split(key, 5)
        w1, b1 = linear(k1, in_dim, hidden)
        bn1 = bn(k2, hidden)
        w2, b2 = linear(k3, hidden, hidden)
        bn2 = bn(k4, hidden)
        convs.append(dict(w1=w1, b1=b1, bn1=bn1, w2=w2, b2=b2, bn2=bn2))
        in_dim = hidden

    key, k1, k2 = jax.random.split(key, 3)
    lin1_w, lin1_b = linear(k1, num_layers * hidden, hidden)
    lin2_w, lin2_b = linear(k2, hidden, num_classes)
    return dict(convs=convs, lin1_w=lin1_w, lin1_b=lin1_b,
                lin2_w=lin2_w, lin2_b=lin2_b)


def _fold_bn_into_linear(w, b, bn_params, eps=1e-5):
    gamma, beta, mean, var = bn_params
    scale = gamma / jnp.sqrt(var + eps)
    shift = beta - mean * scale
    return w * scale[None, :], b * scale + shift


def pack_params(raw, num_features, hidden, num_layers, num_classes, num_graphs):
    """Fold BN, pad layer-0 input rows, pack everything into 2 slabs:
         w_slab bf16 [(L+1)*H, max(3H, Cpad)]:
             rows l*H:(l+1)*H -> w1_l | w2_l | lw1_block_l (lanes 0:H, H:2H, 2H:3H)
             rows L*H:(L+1)*H -> lw2 (lanes 0:Cpad)
         f_slab f32  [2L+2+Gp, max(H, Cpad)]:
             rows 0:L -> b1_l ; rows L:2L -> b2_l ; row 2L -> lb1 ; row 2L+1 -> lb2
             rows 2L+2:2L+2+Gp, lane 0 -> inverse graph sizes (filled in glue)
    """
    assert num_features <= hidden, "packing assumes num_features <= hidden"
    cpad = pl.cdiv(num_classes, _LANE) * _LANE
    gp = pl.cdiv(num_graphs, _SUBLANE) * _SUBLANE
    wcol = max(3 * hidden, cpad)
    fcol = max(hidden, cpad)

    w_slab = jnp.zeros(((num_layers + 1) * hidden, wcol), jnp.float32)
    f_slab = jnp.zeros((2 * num_layers + 2 + gp, fcol), jnp.float32)

    for layer, conv in enumerate(raw["convs"]):
        w1, b1 = _fold_bn_into_linear(conv["w1"], conv["b1"], conv["bn1"])
        w2, b2 = _fold_bn_into_linear(conv["w2"], conv["b2"], conv["bn2"])
        if layer == 0 and num_features < hidden:
            w1 = jnp.pad(w1, ((0, hidden - num_features), (0, 0)))
        lw1_block = raw["lin1_w"][layer * hidden:(layer + 1) * hidden, :]
        r0, r1 = layer * hidden, (layer + 1) * hidden
        w_slab = w_slab.at[r0:r1, 0:hidden].set(w1)
        w_slab = w_slab.at[r0:r1, hidden:2 * hidden].set(w2)
        w_slab = w_slab.at[r0:r1, 2 * hidden:3 * hidden].set(lw1_block)
        f_slab = f_slab.at[layer, :hidden].set(b1)
        f_slab = f_slab.at[num_layers + layer, :hidden].set(b2)

    w_slab = w_slab.at[num_layers * hidden:(num_layers + 1) * hidden,
                       0:num_classes].set(raw["lin2_w"])
    f_slab = f_slab.at[2 * num_layers, :hidden].set(raw["lin1_b"])
    f_slab = f_slab.at[2 * num_layers + 1, :num_classes].set(raw["lin2_b"])

    return dict(w_slab=w_slab.astype(jnp.bfloat16), f_slab=f_slab)


# ---------------------------------------------------------------------------
# Full forward pass (plain-JAX glue: adjacency / pooling matrix / packing)
# ---------------------------------------------------------------------------

def gin_forward(x, edge_index, batch, packed, *, num_graphs, num_classes,
                hidden, num_layers):
    n, num_features = x.shape
    npad = pl.cdiv(n, _LANE) * _LANE
    gp = pl.cdiv(num_graphs, _SUBLANE) * _SUBLANE
    cpad = pl.cdiv(num_classes, _LANE) * _LANE

    # Dense A_hat = A + I with A[i, j] = #edges j -> i; folds (1+eps)*x, eps=0.
    src, dst = edge_index[0], edge_index[1]
    adj_hat = (jnp.zeros((n, n), jnp.float32).at[dst, src].add(1.0)
               + jnp.eye(n, dtype=jnp.float32))

    # Node slab: [A_hat (lanes 0:N, tile-aligned) | X (lanes Npad:Npad+H)] bf16.
    # Adjacency holds small integer counts -> exact in bf16.
    node_slab = jnp.zeros((n, npad + hidden), jnp.float32)
    node_slab = node_slab.at[:, :n].set(adj_hat)
    node_slab = node_slab.at[:, npad:npad + num_features].set(x)
    node_slab = node_slab.astype(jnp.bfloat16)

    # One-hot pool matrix (0/1 -> exact in bf16) + exact f32 inverse counts.
    onehot = (batch[None, :] == jnp.arange(gp)[:, None]).astype(jnp.float32)
    counts = jnp.maximum(onehot.sum(axis=1), 1.0)
    inv_counts = 1.0 / counts                                   # [Gp] f32
    pool = onehot.astype(jnp.bfloat16)                          # [Gp, N] bf16

    # Write runtime inverse counts into the packed f32 slab (tiny XLA update).
    f_slab = packed["f_slab"].at[2 * num_layers + 2:2 * num_layers + 2 + gp,
                                 0].set(inv_counts)

    operands = (node_slab, pool, packed["w_slab"], f_slab)
    op_bytes = sum(int(a.size) * a.dtype.itemsize for a in operands)
    vmem_limit = int(min(max(2 * op_bytes + gp * cpad * 4 * 2 + (8 << 20),
                             16 << 20), 32 << 20))

    kernel = functools.partial(_gin_fused_kernel, h=hidden,
                               num_layers=num_layers, npad=npad)
    out_pad = pl.pallas_call(
        kernel,
        out_shape=jax.ShapeDtypeStruct((gp, cpad), jnp.float32),
        in_specs=[_VMEM] * 4,
        out_specs=_VMEM,
        compiler_params=pltpu.CompilerParams(vmem_limit_bytes=vmem_limit),
    )(*operands)
    # Padded graph rows hold relu(lb1)@lw2 + lb2 (not zeros); slice them off.
    return out_pad[:num_graphs, :num_classes]


# ---------------------------------------------------------------------------
# Main
# ---------------------------------------------------------------------------

if __name__ == "__main__":
    NUM_FEATURES = 8
    HIDDEN = 32
    NUM_LAYERS = 3
    NUM_CLASSES = 4
    NUM_GRAPHS = 2
    NODES_PER_GRAPH = 8
    N = NUM_GRAPHS * NODES_PER_GRAPH   # 16 nodes total

    key = jax.random.PRNGKey(0)
    key, kx = jax.random.split(key)
    x = jax.random.normal(kx, (N, NUM_FEATURES), jnp.float32)

    # Two bidirectional ring graphs of 8 nodes each (deterministic edge_index).
    src_list, dst_list = [], []
    for g in range(NUM_GRAPHS):
        base = g * NODES_PER_GRAPH
        for i in range(NODES_PER_GRAPH):
            a = base + i
            b = base + (i + 1) % NODES_PER_GRAPH
            src_list += [a, b]
            dst_list += [b, a]
    edge_index = jnp.array([src_list, dst_list], dtype=jnp.int32)
    batch = jnp.repeat(jnp.arange(NUM_GRAPHS, dtype=jnp.int32), NODES_PER_GRAPH)

    raw_params = init_params(key, NUM_FEATURES, HIDDEN, NUM_LAYERS, NUM_CLASSES)
    packed_params = pack_params(raw_params, NUM_FEATURES, HIDDEN,
                                NUM_LAYERS, NUM_CLASSES, NUM_GRAPHS)

    fwd = jax.jit(functools.partial(gin_forward,
                                    num_graphs=NUM_GRAPHS,
                                    num_classes=NUM_CLASSES,
                                    hidden=HIDDEN,
                                    num_layers=NUM_LAYERS))
    out = fwd(x, edge_index, batch, packed_params)
    out = jax.block_until_ready(out)

    assert out.shape == (NUM_GRAPHS, NUM_CLASSES), out.shape
    assert jnp.all(jnp.isfinite(out))
    print("KERNEL_OK")
</pallas_src>

<mosaic_0001>
module attributes {stable_mosaic.version = 11 : i64} {
  func.func @_gin_fused_kernel(%arg0: memref<16x160xbf16, #tpu.memory_space<vmem>>, %arg1: memref<8x16xbf16, #tpu.memory_space<vmem>>, %arg2: memref<128x128xbf16, #tpu.memory_space<vmem>>, %arg3: memref<16x128xf32, #tpu.memory_space<vmem>>, %arg4: memref<8x128xf32, #tpu.memory_space<vmem>>) attributes {dimension_semantics = [], scalar_prefetch = 0 : i64, scratch_operands = 0 : i64, tpu.core_type = #tpu.core_type<tc>} {
    %c0 = arith.constant 0 : index
    %c0_0 = arith.constant 0 : index
    %0 = vector.load %arg0[%c0, %c0_0] : memref<16x160xbf16, #tpu.memory_space<vmem>>, vector<16x160xbf16>
    %1 = vector.extract_strided_slice %0 {offsets = [0, 0], sizes = [16, 16], strides = [1, 1]} : vector<16x160xbf16> to vector<16x16xbf16>
    %2 = vector.extract_strided_slice %0 {offsets = [0, 128], sizes = [16, 32], strides = [1, 1]} : vector<16x160xbf16> to vector<16x32xbf16>
    %c0_1 = arith.constant 0 : index
    %c0_2 = arith.constant 0 : index
    %3 = vector.load %arg1[%c0_1, %c0_2] : memref<8x16xbf16, #tpu.memory_space<vmem>>, vector<8x16xbf16>
    %c0_3 = arith.constant 0 : index
    %c0_4 = arith.constant 0 : index
    %4 = vector.load %arg2[%c0_3, %c0_4] : memref<128x128xbf16, #tpu.memory_space<vmem>>, vector<128x128xbf16>
    %c0_5 = arith.constant 0 : index
    %c0_6 = arith.constant 0 : index
    %5 = vector.load %arg3[%c0_5, %c0_6] : memref<16x128xf32, #tpu.memory_space<vmem>>, vector<16x128xf32>
    %6 = vector.extract_strided_slice %5 {offsets = [8, 0], sizes = [8, 1], strides = [1, 1]} : vector<16x128xf32> to vector<8x1xf32>
    %7 = vector.extract_strided_slice %5 {offsets = [6, 0], sizes = [1, 32], strides = [1, 1]} : vector<16x128xf32> to vector<1x32xf32>
    %8 = vector.extract_strided_slice %5 {offsets = [7, 0], sizes = [1, 128], strides = [1, 1]} : vector<16x128xf32> to vector<1x128xf32>
    %9 = vector.extract_strided_slice %4 {offsets = [96, 0], sizes = [32, 128], strides = [1, 1]} : vector<128x128xbf16> to vector<32x128xbf16>
    %cst = arith.constant 0.000000e+00 : f32
    %10 = vector.broadcast %cst : f32 to vector<8x32xf32>
    %11 = vector.extract_strided_slice %4 {offsets = [0, 0], sizes = [32, 32], strides = [1, 1]} : vector<128x128xbf16> to vector<32x32xbf16>
    %12 = vector.extract_strided_slice %4 {offsets = [0, 32], sizes = [32, 32], strides = [1, 1]} : vector<128x128xbf16> to vector<32x32xbf16>
    %13 = vector.extract_strided_slice %4 {offsets = [0, 64], sizes = [32, 32], strides = [1, 1]} : vector<128x128xbf16> to vector<32x32xbf16>
    %14 = vector.extract_strided_slice %5 {offsets = [0, 0], sizes = [1, 32], strides = [1, 1]} : vector<16x128xf32> to vector<1x32xf32>
    %15 = vector.extract_strided_slice %5 {offsets = [3, 0], sizes = [1, 32], strides = [1, 1]} : vector<16x128xf32> to vector<1x32xf32>
    %cst_7 = arith.constant dense<0.000000e+00> : vector<16x32xf32>
    %16 = tpu.matmul %1, %2, %cst_7 {dimension_numbers = #tpu.dot_dimension_numbers<[1], [0], [0], [1], [0, 0, 1, 1], [], []>} : vector<16x16xbf16>, vector<16x32xbf16>, vector<16x32xf32> -> vector<16x32xf32>
    %17 = arith.truncf %16 : vector<16x32xf32> to vector<16x32xbf16>
    %cst_8 = arith.constant dense<0.000000e+00> : vector<16x32xf32>
    %18 = tpu.matmul %17, %11, %cst_8 {dimension_numbers = #tpu.dot_dimension_numbers<[1], [0], [0], [1], [0, 0, 1, 1], [], []>} : vector<16x32xbf16>, vector<32x32xbf16>, vector<16x32xf32> -> vector<16x32xf32>
    %19 = vector.broadcast %14 : vector<1x32xf32> to vector<16x32xf32>
    %20 = arith.addf %18, %19 : vector<16x32xf32>
    %cst_9 = arith.constant 0.000000e+00 : f32
    %21 = vector.broadcast %cst_9 : f32 to vector<16x32xf32>
    %22 = arith.maximumf %20, %21 : vector<16x32xf32>
    %23 = arith.truncf %22 : vector<16x32xf32> to vector<16x32xbf16>
    %cst_10 = arith.constant dense<0.000000e+00> : vector<16x32xf32>
    %24 = tpu.matmul %23, %12, %cst_10 {dimension_numbers = #tpu.dot_dimension_numbers<[1], [0], [0], [1], [0, 0, 1, 1], [], []>} : vector<16x32xbf16>, vector<32x32xbf16>, vector<16x32xf32> -> vector<16x32xf32>
    %25 = vector.broadcast %15 : vector<1x32xf32> to vector<16x32xf32>
    %26 = arith.addf %24, %25 : vector<16x32xf32>
    %cst_11 = arith.constant 0.000000e+00 : f32
    %27 = vector.broadcast %cst_11 : f32 to vector<16x32xf32>
    %28 = arith.maximumf %26, %27 : vector<16x32xf32>
    %29 = arith.truncf %28 : vector<16x32xf32> to vector<16x32xbf16>
    %cst_12 = arith.constant dense<0.000000e+00> : vector<8x32xf32>
    %30 = tpu.matmul %3, %29, %cst_12 {dimension_numbers = #tpu.dot_dimension_numbers<[1], [0], [0], [1], [0, 0, 1, 1], [], []>} : vector<8x16xbf16>, vector<16x32xbf16>, vector<8x32xf32> -> vector<8x32xf32>
    %31 = vector.broadcast %6 : vector<8x1xf32> to vector<8x32xf32>
    %32 = arith.mulf %30, %31 : vector<8x32xf32>
    %33 = arith.truncf %32 : vector<8x32xf32> to vector<8x32xbf16>
    %cst_13 = arith.constant dense<0.000000e+00> : vector<8x32xf32>
    %34 = tpu.matmul %33, %13, %cst_13 {dimension_numbers = #tpu.dot_dimension_numbers<[1], [0], [0], [1], [0, 0, 1, 1], [], []>} : vector<8x32xbf16>, vector<32x32xbf16>, vector<8x32xf32> -> vector<8x32xf32>
    %35 = arith.addf %10, %34 : vector<8x32xf32>
    %36 = vector.extract_strided_slice %4 {offsets = [32, 0], sizes = [32, 32], strides = [1, 1]} : vector<128x128xbf16> to vector<32x32xbf16>
    %37 = vector.extract_strided_slice %4 {offsets = [32, 32], sizes = [32, 32], strides = [1, 1]} : vector<128x128xbf16> to vector<32x32xbf16>
    %38 = vector.extract_strided_slice %4 {offsets = [32, 64], sizes = [32, 32], strides = [1, 1]} : vector<128x128xbf16> to vector<32x32xbf16>
    %39 = vector.extract_strided_slice %5 {offsets = [1, 0], sizes = [1, 32], strides = [1, 1]} : vector<16x128xf32> to vector<1x32xf32>
    %40 = vector.extract_strided_slice %5 {offsets = [4, 0], sizes = [1, 32], strides = [1, 1]} : vector<16x128xf32> to vector<1x32xf32>
    %cst_14 = arith.constant dense<0.000000e+00> : vector<16x32xf32>
    %41 = tpu.matmul %1, %29, %cst_14 {dimension_numbers = #tpu.dot_dimension_numbers<[1], [0], [0], [1], [0, 0, 1, 1], [], []>} : vector<16x16xbf16>, vector<16x32xbf16>, vector<16x32xf32> -> vector<16x32xf32>
    %42 = arith.truncf %41 : vector<16x32xf32> to vector<16x32xbf16>
    %cst_15 = arith.constant dense<0.000000e+00> : vector<16x32xf32>
    %43 = tpu.matmul %42, %36, %cst_15 {dimension_numbers = #tpu.dot_dimension_numbers<[1], [0], [0], [1], [0, 0, 1, 1], [], []>} : vector<16x32xbf16>, vector<32x32xbf16>, vector<16x32xf32> -> vector<16x32xf32>
    %44 = vector.broadcast %39 : vector<1x32xf32> to vector<16x32xf32>
    %45 = arith.addf %43, %44 : vector<16x32xf32>
    %cst_16 = arith.constant 0.000000e+00 : f32
    %46 = vector.broadcast %cst_16 : f32 to vector<16x32xf32>
    %47 = arith.maximumf %45, %46 : vector<16x32xf32>
    %48 = arith.truncf %47 : vector<16x32xf32> to vector<16x32xbf16>
    %cst_17 = arith.constant dense<0.000000e+00> : vector<16x32xf32>
    %49 = tpu.matmul %48, %37, %cst_17 {dimension_numbers = #tpu.dot_dimension_numbers<[1], [0], [0], [1], [0, 0, 1, 1], [], []>} : vector<16x32xbf16>, vector<32x32xbf16>, vector<16x32xf32> -> vector<16x32xf32>
    %50 = vector.broadcast %40 : vector<1x32xf32> to vector<16x32xf32>
    %51 = arith.addf %49, %50 : vector<16x32xf32>
    %cst_18 = arith.constant 0.000000e+00 : f32
    %52 = vector.broadcast %cst_18 : f32 to vector<16x32xf32>
    %53 = arith.maximumf %51, %52 : vector<16x32xf32>
    %54 = arith.truncf %53 : vector<16x32xf32> to vector<16x32xbf16>
    %cst_19 = arith.constant dense<0.000000e+00> : vector<8x32xf32>
    %55 = tpu.matmul %3, %54, %cst_19 {dimension_numbers = #tpu.dot_dimension_numbers<[1], [0], [0], [1], [0, 0, 1, 1], [], []>} : vector<8x16xbf16>, vector<16x32xbf16>, vector<8x32xf32> -> vector<8x32xf32>
    %56 = vector.broadcast %6 : vector<8x1xf32> to vector<8x32xf32>
    %57 = arith.mulf %55, %56 : vector<8x32xf32>
    %58 = arith.truncf %57 : vector<8x32xf32> to vector<8x32xbf16>
    %cst_20 = arith.constant dense<0.000000e+00> : vector<8x32xf32>
    %59 = tpu.matmul %58, %38, %cst_20 {dimension_numbers = #tpu.dot_dimension_numbers<[1], [0], [0], [1], [0, 0, 1, 1], [], []>} : vector<8x32xbf16>, vector<32x32xbf16>, vector<8x32xf32> -> vector<8x32xf32>
    %60 = arith.addf %35, %59 : vector<8x32xf32>
    %61 = vector.extract_strided_slice %4 {offsets = [64, 0], sizes = [32, 32], strides = [1, 1]} : vector<128x128xbf16> to vector<32x32xbf16>
    %62 = vector.extract_strided_slice %4 {offsets = [64, 32], sizes = [32, 32], strides = [1, 1]} : vector<128x128xbf16> to vector<32x32xbf16>
    %63 = vector.extract_strided_slice %4 {offsets = [64, 64], sizes = [32, 32], strides = [1, 1]} : vector<128x128xbf16> to vector<32x32xbf16>
    %64 = vector.extract_strided_slice %5 {offsets = [2, 0], sizes = [1, 32], strides = [1, 1]} : vector<16x128xf32> to vector<1x32xf32>
    %65 = vector.extract_strided_slice %5 {offsets = [5, 0], sizes = [1, 32], strides = [1, 1]} : vector<16x128xf32> to vector<1x32xf32>
    %cst_21 = arith.constant dense<0.000000e+00> : vector<16x32xf32>
    %66 = tpu.matmul %1, %54, %cst_21 {dimension_numbers = #tpu.dot_dimension_numbers<[1], [0], [0], [1], [0, 0, 1, 1], [], []>} : vector<16x16xbf16>, vector<16x32xbf16>, vector<16x32xf32> -> vector<16x32xf32>
    %67 = arith.truncf %66 : vector<16x32xf32> to vector<16x32xbf16>
    %cst_22 = arith.constant dense<0.000000e+00> : vector<16x32xf32>
    %68 = tpu.matmul %67, %61, %cst_22 {dimension_numbers = #tpu.dot_dimension_numbers<[1], [0], [0], [1], [0, 0, 1, 1], [], []>} : vector<16x32xbf16>, vector<32x32xbf16>, vector<16x32xf32> -> vector<16x32xf32>
    %69 = vector.broadcast %64 : vector<1x32xf32> to vector<16x32xf32>
    %70 = arith.addf %68, %69 : vector<16x32xf32>
    %cst_23 = arith.constant 0.000000e+00 : f32
    %71 = vector.broadcast %cst_23 : f32 to vector<16x32xf32>
    %72 = arith.maximumf %70, %71 : vector<16x32xf32>
    %73 = arith.truncf %72 : vector<16x32xf32> to vector<16x32xbf16>
    %cst_24 = arith.constant dense<0.000000e+00> : vector<16x32xf32>
    %74 = tpu.matmul %73, %62, %cst_24 {dimension_numbers = #tpu.dot_dimension_numbers<[1], [0], [0], [1], [0, 0, 1, 1], [], []>} : vector<16x32xbf16>, vector<32x32xbf16>, vector<16x32xf32> -> vector<16x32xf32>
    %75 = vector.broadcast %65 : vector<1x32xf32> to vector<16x32xf32>
    %76 = arith.addf %74, %75 : vector<16x32xf32>
    %cst_25 = arith.constant 0.000000e+00 : f32
    %77 = vector.broadcast %cst_25 : f32 to vector<16x32xf32>
    %78 = arith.maximumf %76, %77 : vector<16x32xf32>
    %79 = arith.truncf %78 : vector<16x32xf32> to vector<16x32xbf16>
    %cst_26 = arith.constant dense<0.000000e+00> : vector<8x32xf32>
    %80 = tpu.matmul %3, %79, %cst_26 {dimension_numbers = #tpu.dot_dimension_numbers<[1], [0], [0], [1], [0, 0, 1, 1], [], []>} : vector<8x16xbf16>, vector<16x32xbf16>, vector<8x32xf32> -> vector<8x32xf32>
    %81 = vector.broadcast %6 : vector<8x1xf32> to vector<8x32xf32>
    %82 = arith.mulf %80, %81 : vector<8x32xf32>
    %83 = arith.truncf %82 : vector<8x32xf32> to vector<8x32xbf16>
    %cst_27 = arith.constant dense<0.000000e+00> : vector<8x32xf32>
    %84 = tpu.matmul %83, %63, %cst_27 {dimension_numbers = #tpu.dot_dimension_numbers<[1], [0], [0], [1], [0, 0, 1, 1], [], []>} : vector<8x32xbf16>, vector<32x32xbf16>, vector<8x32xf32> -> vector<8x32xf32>
    %85 = arith.addf %60, %84 : vector<8x32xf32>
    %86 = vector.broadcast %7 : vector<1x32xf32> to vector<8x32xf32>
    %87 = arith.addf %85, %86 : vector<8x32xf32>
    %cst_28 = arith.constant 0.000000e+00 : f32
    %88 = vector.broadcast %cst_28 : f32 to vector<8x32xf32>
    %89 = arith.maximumf %87, %88 : vector<8x32xf32>
    %90 = arith.truncf %89 : vector<8x32xf32> to vector<8x32xbf16>
    %cst_29 = arith.constant dense<0.000000e+00> : vector<8x128xf32>
    %91 = tpu.matmul %90, %9, %cst_29 {dimension_numbers = #tpu.dot_dimension_numbers<[1], [0], [0], [1], [0, 0, 1, 1], [], []>} : vector<8x32xbf16>, vector<32x128xbf16>, vector<8x128xf32> -> vector<8x128xf32>
    %92 = vector.broadcast %8 : vector<1x128xf32> to vector<8x128xf32>
    %93 = arith.addf %91, %92 : vector<8x128xf32>
    %c0_30 = arith.constant 0 : index
    %c0_31 = arith.constant 0 : index
    %94 = vector.load %arg4[%c0_30, %c0_31] : memref<8x128xf32, #tpu.memory_space<vmem>>, vector<8x128xf32>
    tpu.vector_store %arg4[%c0_30, %c0_31], %93 {strides = array<i32>} : memref<8x128xf32, #tpu.memory_space<vmem>>, vector<8x128xf32>,
    return
  }
}

</mosaic_0001>

<llo_original>
// kernel: gin_forward.1
$region0: #{gin_forward.1}
  #allocation0 [shape = 'u32[]', space=smem, size = 0x4, offset = 0x4, fixed_abs, tag = 'smem constant byte address 0x4 - core index']
  #allocation1 [shape = 'u32[72,128]{1,0:T(1,128)}', space=vmem, size = 0x9000, scoped, tag = 'internal scratch']
  %s0 = inlined_call_operand.vmem [shape: bf16[16,160], index: 0, kind: input, shape index: {}]
  %s1 = inlined_call_operand.vmem [shape: bf16[8,16], index: 1, kind: input, shape index: {}]
  %s2 = inlined_call_operand.vmem [shape: bf16[128,128], index: 2, kind: input, shape index: {}]
  %s3 = inlined_call_operand.vmem [shape: f32[16,128], index: 3, kind: input, shape index: {}]
  %s4 = inlined_call_operand.vmem [shape: f32[8,128], index: 4, kind: output, shape index: {}]
  %s5 = sld [smem:[#allocation0]]
  $region26: #{gin_forward.1} parent=0
    _
  %s7 = ssub.s32 1, %s5
  %s8 = scalar_select 0, %s7, %s5
  // Predicated region
  $region2: #{gin_forward.1} parent=0 // pred_check
    _
  $region3: #{gin_forward.1} parent=0 // pred_check_branch
    %10 = sbr.rel (0) target = $region5
  $region4: #{gin_forward.1} parent=0 // pred_region
    _
  $region5: #{gin_forward.1} parent=0 // pred_fallthru
    _
  // Predicated region
  $region6: #{gin_forward.1} parent=0 // pred_check
    _
  $region7: #{gin_forward.1} parent=0 // pred_check_branch
    %12 = sbr.rel (0) target = $region9
  $region8: #{gin_forward.1} parent=0 // pred_region
    _
  $region9: #{gin_forward.1} parent=0 // pred_fallthru
    _
  // Predicated region
  $region10: #{gin_forward.1} parent=0 // pred_check
    _
  $region11: #{gin_forward.1} parent=0 // pred_check_branch
    %14 = sbr.rel (0) target = $region13
  $region12: #{gin_forward.1} parent=0 // pred_region
    _
  $region13: #{gin_forward.1} parent=0 // pred_fallthru
    _
  // Predicated region
  $region14: #{gin_forward.1} parent=0 // pred_check
    _
  $region15: #{gin_forward.1} parent=0 // pred_check_branch
    %16 = sbr.rel (0) target = $region17
  $region16: #{gin_forward.1} parent=0 // pred_region
    _
  $region17: #{gin_forward.1} parent=0 // pred_fallthru
    _
  %v18 = vld [vmem:[%s0] sm:$0xff]
  %v19 = vld [vmem:[%s0 + $0x8] sm:$0xff]
  %v20 = vld [vmem:[%s1] sm:$0xf]
  %v21 = vld [vmem:[%s2] sm:$0xf]
  %v22 = vld [vmem:[%s2 + $0x4] sm:$0xf]
  %v23 = vld [vmem:[%s2 + $0x8] sm:$0xf]
  %v24 = vld [vmem:[%s2 + $0xc] sm:$0xf]
  %v25 = vld [vmem:[%s2 + $0x10] sm:$0xf]
  %v26 = vld [vmem:[%s2 + $0x14] sm:$0xf]
  %v27 = vld [vmem:[%s2 + $0x18] sm:$0xf]
  %v28 = vld [vmem:[%s2 + $0x1c] sm:$0xf]
  %v29 = vld [vmem:[%s2 + $0x20] sm:$0xf]
  %v30 = vld [vmem:[%s2 + $0x24] sm:$0xf]
  %v31 = vld [vmem:[%s2 + $0x28] sm:$0xf]
  %v32 = vld [vmem:[%s2 + $0x2c] sm:$0xf]
  %v33 = vld [vmem:[%s2 + $0x30] sm:$0xf]
  %v34 = vld [vmem:[%s2 + $0x34] sm:$0xf]
  %v35 = vld [vmem:[%s2 + $0x38] sm:$0xf]
  %v36 = vld [vmem:[%s2 + $0x3c] sm:$0xf]
  %v37 = vld [vmem:[%s3] sm:$0xff]
  %v38 = vld [vmem:[%s3 + $0x8] sm:$0xff]
  %v41 = vunpack.c.l.b16 %v18
  %v42 = vunpack.c.l.b16 %v19
  %v43 = vpack.c.b16 %v42, %v41
  %v44 = vunpack.c.h.b16 %v18
  %v45 = vunpack.c.h.b16 %v19
  %v46 = vpack.c.b16 %v45, %v44
  %vm48 = vcmask 130048
  %v50 = vsel %vm48, %v43, 0
  %52 = vmatpush.bf16.msra.mxu0 0
  %53 = vmatpush.bf16.msra.mxu0 0
  %54 = vmatpush.bf16.msra.mxu0 0
  %55 = vmatpush.bf16.msra.mxu0 0
  %56 = vmatpush.bf16.msra.mxu0 0
  %57 = vmatpush.bf16.msra.mxu0 0
  %58 = vmatpush.bf16.msra.mxu0 0
  %59 = vmatpush.bf16.msra.mxu0 %v46
  %60 = vmatmul.bf16.gmra.mxu0 %v50
  %v61 = vpop.f32.mrf.mxu0
  %v62 = vadd.f32 0.0, %v61
  %v63 = vpop.f32.mrf.mxu0
  %v64 = vadd.f32 0.0, %v63
  %65 = vdwg.mxu0
  %v66 = vpack.c.bf16 %v64, %v62
  %v67 = vperm.slane %v37, 0
  %v72 = vunpack.c.l.b16 %v21
  %v73 = vunpack.c.l.b16 %v22
  %v74 = vunpack.c.l.b16 %v23
  %v75 = vunpack.c.l.b16 %v24
  %v76 = vpack.c.b16 %v73, %v72
  %v77 = vpack.c.b16 %v75, %v74
  %vm80 = vcmask 261120
  %v82 = vsel %vm80, %v66, 0
  %84 = vmatpush.bf16.msra.mxu0 0
  %85 = vmatpush.bf16.msra.mxu0 0
  %86 = vmatpush.bf16.msra.mxu0 0
  %87 = vmatpush.bf16.msra.mxu0 0
  %88 = vmatpush.bf16.msra.mxu0 0
  %89 = vmatpush.bf16.msra.mxu0 0
  %90 = vmatpush.bf16.msra.mxu0 %v77
  %91 = vmatpush.bf16.msra.mxu0 %v76
  %92 = vmatmul.bf16.gmra.mxu0 %v82
  %v93 = vpop.f32.mrf.mxu0
  %v94 = vadd.f32 %v67, %v93
  %v95 = vpop.f32.mrf.mxu0
  %v96 = vadd.f32 %v67, %v95
  %97 = vdwg.mxu0
  %v98 = vmax.f32 %v94, 0.0
  %v99 = vmax.f32 %v96, 0.0
  %v100 = vpack.c.bf16 %v99, %v98
  %v101 = vperm.slane %v37, 3
  %102 = vrot.lane.b32.xlu0 %v76, 96
  %v103 = vpop.permute.xlu0 %102
  %104 = vrot.lane.b32.xlu0 %v77, 96
  %v105 = vpop.permute.xlu0 %104
  %v109 = vsel %vm80, %v100, 0
  %111 = vmatpush.bf16.msra.mxu0 0
  %112 = vmatpush.bf16.msra.mxu0 0
  %113 = vmatpush.bf16.msra.mxu0 0
  %114 = vmatpush.bf16.msra.mxu0 0
  %115 = vmatpush.bf16.msra.mxu0 0
  %116 = vmatpush.bf16.msra.mxu0 0
  %117 = vmatpush.bf16.msra.mxu0 %v105
  %118 = vmatpush.bf16.msra.mxu0 %v103
  %119 = vmatmul.bf16.gmra.mxu0 %v109
  %v120 = vpop.f32.mrf.mxu0
  %v121 = vadd.f32 %v101, %v120
  %v122 = vpop.f32.mrf.mxu0
  %v123 = vadd.f32 %v101, %v122
  %124 = vdwg.mxu0
  %v125 = vmax.f32 %v121, 0.0
  %v126 = vmax.f32 %v123, 0.0
  %v127 = vpack.c.bf16 %v126, %v125
  %v129 = vsel %vm48, %v20, 0
  %131 = vmatpush.bf16.msra.mxu0 0
  %132 = vmatpush.bf16.msra.mxu0 0
  %133 = vmatpush.bf16.msra.mxu0 0
  %134 = vmatpush.bf16.msra.mxu0 0
  %135 = vmatpush.bf16.msra.mxu0 0
  %136 = vmatpush.bf16.msra.mxu0 0
  %137 = vmatpush.bf16.msra.mxu0 0
  %138 = vmatpush.bf16.msra.mxu0 %v127
  %139 = vmatmul.bf16.gmra.mxu0 %v129
  %v140 = vpop.f32.mrf.mxu0
  %v141 = vadd.f32 0.0, %v140
  %v142 = vpop.f32.mrf.mxu0
  %143 = vdwg.mxu0
  %145 = vset.pattern.permute.xlu0 0
  %146 = vperm.xlu0 %145, %v38
  %v147 = vpop.permute.xlu0 %146
  %v149 = vmul.f32 %v141, %v147
  %v150 = vpack.c.bf16 %v149, %v149
  %151 = vmatpush.bf16.msra.mxu0 0
  %152 = vmatpush.bf16.msra.mxu0 0
  %153 = vmatpush.bf16.msra.mxu0 0
  %154 = vmatpush.bf16.msra.mxu0 0
  %155 = vmatpush.bf16.msra.mxu0 0
  %156 = vmatpush.bf16.msra.mxu0 0
  %157 = vmatpush.bf16.msra.mxu0 0
  %158 = vmatpush.bf16.msra.mxu0 %v127
  %159 = vmatmul.bf16.gmra.mxu0 %v50
  %v160 = vpop.f32.mrf.mxu0
  %v161 = vadd.f32 0.0, %v160
  %v162 = vpop.f32.mrf.mxu0
  %v163 = vadd.f32 0.0, %v162
  %164 = vdwg.mxu0
  %v165 = vpack.c.bf16 %v163, %v161
  %v166 = vperm.slane %v37, 1
  %v171 = vunpack.c.l.b16 %v25
  %v172 = vunpack.c.l.b16 %v26
  %v173 = vunpack.c.l.b16 %v27
  %v174 = vunpack.c.l.b16 %v28
  %v175 = vpack.c.b16 %v172, %v171
  %v176 = vpack.c.b16 %v174, %v173
  %v180 = vsel %vm80, %v165, 0
  %182 = vmatpush.bf16.msra.mxu0 0
  %183 = vmatpush.bf16.msra.mxu0 0
  %184 = vmatpush.bf16.msra.mxu0 0
  %185 = vmatpush.bf16.msra.mxu0 0
  %186 = vmatpush.bf16.msra.mxu0 0
  %187 = vmatpush.bf16.msra.mxu0 0
  %188 = vmatpush.bf16.msra.mxu0 %v176
  %189 = vmatpush.bf16.msra.mxu0 %v175
  %190 = vmatmul.bf16.gmra.mxu0 %v180
  %v191 = vpop.f32.mrf.mxu0
  %v192 = vadd.f32 %v166, %v191
  %v193 = vpop.f32.mrf.mxu0
  %v194 = vadd.f32 %v166, %v193
  %195 = vdwg.mxu0
  %v196 = vmax.f32 %v192, 0.0
  %v197 = vmax.f32 %v194, 0.0
  %v198 = vpack.c.bf16 %v197, %v196
  %v199 = vperm.slane %v37, 4
  %200 = vrot.lane.b32.xlu0 %v175, 96
  %v201 = vpop.permute.xlu0 %200
  %202 = vrot.lane.b32.xlu0 %v176, 96
  %v203 = vpop.permute.xlu0 %202
  %v207 = vsel %vm80, %v198, 0
  %209 = vmatpush.bf16.msra.mxu0 0
  %210 = vmatpush.bf16.msra.mxu0 0
  %211 = vmatpush.bf16.msra.mxu0 0
  %212 = vmatpush.bf16.msra.mxu0 0
  %213 = vmatpush.bf16.msra.mxu0 0
  %214 = vmatpush.bf16.msra.mxu0 0
  %215 = vmatpush.bf16.msra.mxu0 %v203
  %216 = vmatpush.bf16.msra.mxu0 %v201
  %217 = vmatmul.bf16.gmra.mxu0 %v207
  %v218 = vpop.f32.mrf.mxu0
  %v219 = vadd.f32 %v199, %v218
  %v220 = vpop.f32.mrf.mxu0
  %v221 = vadd.f32 %v199, %v220
  %222 = vdwg.mxu0
  %v223 = vmax.f32 %v219, 0.0
  %v224 = vmax.f32 %v221, 0.0
  %v225 = vpack.c.bf16 %v224, %v223
  %226 = vmatpush.bf16.msra.mxu0 0
  %227 = vmatpush.bf16.msra.mxu0 0
  %228 = vmatpush.bf16.msra.mxu0 0
  %229 = vmatpush.bf16.msra.mxu0 0
  %230 = vmatpush.bf16.msra.mxu0 0
  %231 = vmatpush.bf16.msra.mxu0 0
  %232 = vmatpush.bf16.msra.mxu0 0
  %233 = vmatpush.bf16.msra.mxu0 %v225
  %234 = vmatmul.bf16.gmra.mxu0 %v129
  %v235 = vpop.f32.mrf.mxu0
  %v236 = vadd.f32 0.0, %v235
  %v237 = vpop.f32.mrf.mxu0
  %238 = vdwg.mxu0
  %v239 = vmul.f32 %v236, %v147
  %v240 = vpack.c.bf16 %v239, %v239
  %241 = vrot.lane.b32.xlu0 %v175, 64
  %v242 = vpop.permute.xlu0 %241
  %243 = vrot.lane.b32.xlu0 %v176, 64
  %v244 = vpop.permute.xlu0 %243
  %v248 = vsel %vm80, %v240, 0
  %250 = vmatpush.bf16.msra.mxu0 0
  %251 = vmatpush.bf16.msra.mxu0 0
  %252 = vmatpush.bf16.msra.mxu0 0
  %253 = vmatpush.bf16.msra.mxu0 0
  %254 = vmatpush.bf16.msra.mxu0 0
  %255 = vmatpush.bf16.msra.mxu0 0
  %256 = vmatpush.bf16.msra.mxu0 %v244
  %257 = vmatpush.bf16.msra.mxu0 %v242
  %258 = vmatmul.bf16.gmra.mxu0 %v248
  %v259 = vpop.f32.mrf.mxu0
  %v260 = vadd.f32 0.0, %v259
  %v261 = vpop.f32.mrf.mxu0
  %262 = vdwg.mxu0
  %263 = vrot.lane.b32.xlu0 %v76, 64
  %v264 = vpop.permute.xlu0 %263
  %265 = vrot.lane.b32.xlu0 %v77, 64
  %v266 = vpop.permute.xlu0 %265
  %v270 = vsel %vm80, %v150, 0
  %272 = vmatpush.bf16.msra.mxu0 0
  %273 = vmatpush.bf16.msra.mxu0 0
  %274 = vmatpush.bf16.msra.mxu0 0
  %275 = vmatpush.bf16.msra.mxu0 0
  %276 = vmatpush.bf16.msra.mxu0 0
  %277 = vmatpush.bf16.msra.mxu0 0
  %278 = vmatpush.bf16.msra.mxu0 %v266
  %279 = vmatpush.bf16.msra.mxu0 %v264
  %280 = vmatmul.bf16.gmra.mxu0 %v270
  %v281 = vpop.f32.mrf.mxu0
  %v282 = vadd.f32 %v260, %v281
  %v283 = vpop.f32.mrf.mxu0
  %284 = vdwg.mxu0
  %285 = vmatpush.bf16.msra.mxu0 0
  %286 = vmatpush.bf16.msra.mxu0 0
  %287 = vmatpush.bf16.msra.mxu0 0
  %288 = vmatpush.bf16.msra.mxu0 0
  %289 = vmatpush.bf16.msra.mxu0 0
  %290 = vmatpush.bf16.msra.mxu0 0
  %291 = vmatpush.bf16.msra.mxu0 0
  %292 = vmatpush.bf16.msra.mxu0 %v225
  %293 = vmatmul.bf16.gmra.mxu0 %v50
  %v294 = vpop.f32.mrf.mxu0
  %v295 = vadd.f32 0.0, %v294
  %v296 = vpop.f32.mrf.mxu0
  %v297 = vadd.f32 0.0, %v296
  %298 = vdwg.mxu0
  %v299 = vpack.c.bf16 %v297, %v295
  %v300 = vperm.slane %v37, 2
  %v305 = vunpack.c.l.b16 %v29
  %v306 = vunpack.c.l.b16 %v30
  %v307 = vunpack.c.l.b16 %v31
  %v308 = vunpack.c.l.b16 %v32
  %v309 = vpack.c.b16 %v306, %v305
  %v310 = vpack.c.b16 %v308, %v307
  %v314 = vsel %vm80, %v299, 0
  %316 = vmatpush.bf16.msra.mxu0 0
  %317 = vmatpush.bf16.msra.mxu0 0
  %318 = vmatpush.bf16.msra.mxu0 0
  %319 = vmatpush.bf16.msra.mxu0 0
  %320 = vmatpush.bf16.msra.mxu0 0
  %321 = vmatpush.bf16.msra.mxu0 0
  %322 = vmatpush.bf16.msra.mxu0 %v310
  %323 = vmatpush.bf16.msra.mxu0 %v309
  %324 = vmatmul.bf16.gmra.mxu0 %v314
  %v325 = vpop.f32.mrf.mxu0
  %v326 = vadd.f32 %v300, %v325
  %v327 = vpop.f32.mrf.mxu0
  %v328 = vadd.f32 %v300, %v327
  %329 = vdwg.mxu0
  %v330 = vmax.f32 %v326, 0.0
  %v331 = vmax.f32 %v328, 0.0
  %v332 = vpack.c.bf16 %v331, %v330
  %v333 = vperm.slane %v37, 5
  %334 = vrot.lane.b32.xlu0 %v309, 96
  %v335 = vpop.permute.xlu0 %334
  %336 = vrot.lane.b32.xlu0 %v310, 96
  %v337 = vpop.permute.xlu0 %336
  %v341 = vsel %vm80, %v332, 0
  %343 = vmatpush.bf16.msra.mxu0 0
  %344 = vmatpush.bf16.msra.mxu0 0
  %345 = vmatpush.bf16.msra.mxu0 0
  %346 = vmatpush.bf16.msra.mxu0 0
  %347 = vmatpush.bf16.msra.mxu0 0
  %348 = vmatpush.bf16.msra.mxu0 0
  %349 = vmatpush.bf16.msra.mxu0 %v337
  %350 = vmatpush.bf16.msra.mxu0 %v335
  %351 = vmatmul.bf16.gmra.mxu0 %v341
  %v352 = vpop.f32.mrf.mxu0
  %v353 = vadd.f32 %v333, %v352
  %v354 = vpop.f32.mrf.mxu0
  %v355 = vadd.f32 %v333, %v354
  %356 = vdwg.mxu0
  %v357 = vmax.f32 %v353, 0.0
  %v358 = vmax.f32 %v355, 0.0
  %v359 = vpack.c.bf16 %v358, %v357
  %360 = vmatpush.bf16.msra.mxu0 0
  %361 = vmatpush.bf16.msra.mxu0 0
  %362 = vmatpush.bf16.msra.mxu0 0
  %363 = vmatpush.bf16.msra.mxu0 0
  %364 = vmatpush.bf16.msra.mxu0 0
  %365 = vmatpush.bf16.msra.mxu0 0
  %366 = vmatpush.bf16.msra.mxu0 0
  %367 = vmatpush.bf16.msra.mxu0 %v359
  %368 = vmatmul.bf16.gmra.mxu0 %v129
  %v369 = vpop.f32.mrf.mxu0
  %v370 = vadd.f32 0.0, %v369
  %v371 = vpop.f32.mrf.mxu0
  %372 = vdwg.mxu0
  %v373 = vmul.f32 %v370, %v147
  %v374 = vpack.c.bf16 %v373, %v373
  %375 = vrot.lane.b32.xlu0 %v309, 64
  %v376 = vpop.permute.xlu0 %375
  %377 = vrot.lane.b32.xlu0 %v310, 64
  %v378 = vpop.permute.xlu0 %377
  %v382 = vsel %vm80, %v374, 0
  %384 = vmatpush.bf16.msra.mxu0 0
  %385 = vmatpush.bf16.msra.mxu0 0
  %386 = vmatpush.bf16.msra.mxu0 0
  %387 = vmatpush.bf16.msra.mxu0 0
  %388 = vmatpush.bf16.msra.mxu0 0
  %389 = vmatpush.bf16.msra.mxu0 0
  %390 = vmatpush.bf16.msra.mxu0 %v378
  %391 = vmatpush.bf16.msra.mxu0 %v376
  %392 = vmatmul.bf16.gmra.mxu0 %v382
  %v393 = vpop.f32.mrf.mxu0
  %v394 = vadd.f32 0.0, %v393
  %v395 = vpop.f32.mrf.mxu0
  %396 = vdwg.mxu0
  %v397 = vadd.f32 %v282, %v394
  %v398 = vperm.slane %v37, 6
  %v399 = vadd.f32 %v397, %v398
  %v400 = vmax.f32 %v399, 0.0
  %v401 = vpack.c.bf16 %v400, %v400
  %v402 = vperm.slane %v37, 7
  %v407 = vunpack.c.l.b16 %v33
  %v408 = vunpack.c.l.b16 %v34
  %v409 = vunpack.c.l.b16 %v35
  %v410 = vunpack.c.l.b16 %v36
  %v411 = vpack.c.b16 %v408, %v407
  %v412 = vpack.c.b16 %v410, %v409
  %v416 = vsel %vm80, %v401, 0
  %418 = vmatpush.bf16.msra.mxu0 0
  %419 = vmatpush.bf16.msra.mxu0 0
  %420 = vmatpush.bf16.msra.mxu0 0
  %421 = vmatpush.bf16.msra.mxu0 0
  %422 = vmatpush.bf16.msra.mxu0 0
  %423 = vmatpush.bf16.msra.mxu0 0
  %424 = vmatpush.bf16.msra.mxu0 %v412
  %425 = vmatpush.bf16.msra.mxu0 %v411
  %426 = vmatmul.bf16.gmra.mxu0 %v416
  %v427 = vpop.f32.mrf.mxu0
  %v428 = vadd.f32 %v402, %v427
  %v429 = vpop.f32.mrf.mxu0
  %430 = vdwg.mxu0
  %431 = vst [vmem:[%s4] sm:$0xff] %v428
  // Predicated region
  $region18: #{gin_forward.1} parent=0 // pred_check
    _
  $region19: #{gin_forward.1} parent=0 // pred_check_branch
    %433 = sbr.rel (0) target = $region21
  $region20: #{gin_forward.1} parent=0 // pred_region
    _
  $region21: #{gin_forward.1} parent=0 // pred_fallthru
    _
  // Predicated region
  $region22: #{gin_forward.1} parent=0 // pred_check
    _
  $region23: #{gin_forward.1} parent=0 // pred_check_branch
    %435 = sbr.rel (0) target = $region25
  $region24: #{gin_forward.1} parent=0 // pred_region
    _
  $region25: #{gin_forward.1} parent=0 // pred_fallthru
    _

</llo_original>
